<compile_context>
chip_gen: v6e
topology: v6e:2x2x1
jax: 0.10.0
libtpu: 0.0.40
codegen_flags: <defaults>
</compile_context>

<pallas_src>
import functools

import jax
import jax.numpy as jnp
from jax import lax
from jax.experimental import pallas as pl
from jax.experimental.pallas import tpu as pltpu


def _mcdice_kernel(inp_ref, tgt_ref, out_ref, inter_acc, isum_acc, tsum_acc):
    # inp_ref : (N, Cb, hw)  probabilities for Cb consecutive classes
    # tgt_ref : (N, hw)      integer class labels (int8/int32)
    # out_ref : (1, 1, Cb)   per-class dice loss for this class block
    # *_acc   : (N, Cb) f32  running sums across the hw (inner, reduction) axis
    ci = pl.program_id(0)                      # class-block index ("parallel")
    hi = pl.program_id(1)                      # spatial-block index ("arbitrary")

    @pl.when(hi == 0)
    def _():
        inter_acc[...] = jnp.zeros_like(inter_acc)
        isum_acc[...] = jnp.zeros_like(isum_acc)
        tsum_acc[...] = jnp.zeros_like(tsum_acc)

    x = inp_ref[...].astype(jnp.float32)       # (N, Cb, hw), f32 accumulation
    tgt = tgt_ref[...].astype(jnp.int32)       # (N, hw)

    n, cb, _ = x.shape
    # class ids covered by this block: ci*Cb .. ci*Cb + Cb - 1
    cls_ids = ci * cb + lax.broadcasted_iota(jnp.int32, (1, cb, 1), 1)
    onehot = (tgt[:, None, :] == cls_ids).astype(jnp.float32)     # (N, Cb, hw)

    inter_acc[...] += jnp.sum(x * onehot, axis=2)                 # (N, Cb)
    isum_acc[...] += jnp.sum(x, axis=2)                           # (N, Cb)
    tsum_acc[...] += jnp.sum(onehot, axis=2)                      # (N, Cb)

    @pl.when(hi == pl.num_programs(1) - 1)
    def _():
        smooth = 1e-12
        per_n = 2.0 * (inter_acc[...] + smooth) / (
            isum_acc[...] + tsum_acc[...] + smooth)               # (N, Cb)
        dice = 1.0 - jnp.sum(per_n, axis=0, keepdims=True) / n    # (1, Cb)
        out_ref[...] = dice.reshape(1, 1, cb)


def _pick_tile(total, max_tile, mult):
    """Largest t <= max_tile with t % mult == 0 and total % t == 0; else full dim."""
    if total <= max_tile:
        return total
    t = (max_tile // mult) * mult
    while t >= mult:
        if total % t == 0:
            return t
        t -= mult
    return total  # fall back to the full (untiled) dimension


@jax.jit
def multiclass_dice_loss(inp, tgt, weight=None):
    """inp: (N, C, H, W) probabilities; tgt: (N, H, W) integer labels; optional weight[C]."""
    N, C, H, W = inp.shape
    if C < 2:
        raise ValueError("MulticlassDiceLoss requires C >= 2 (class 0 is skipped).")
    HW = H * W

    inp_r = inp.reshape(N, C, HW)                        # free contiguous collapse
    tgt_dtype = jnp.int8 if C <= 127 else jnp.int32
    tgt_r = tgt.reshape(N, HW).astype(tgt_dtype)

    itemsize = jnp.dtype(inp_r.dtype).itemsize
    cb = _pick_tile(C, 32, 8)                            # classes per grid step
    # keep a single input block <= ~4 MiB so 2x double-buffering fits even in
    # v5e's 16 MiB default scoped VMEM / v7x's 64 MiB physical VMEM.
    max_hw = max(128, (4 * 1024 * 1024) // (N * cb * itemsize))
    hw = _pick_tile(HW, max_hw, 128)
    num_cb = C // cb
    num_hw = HW // hw

    out = pl.pallas_call(
        _mcdice_kernel,
        out_shape=jax.ShapeDtypeStruct((num_cb, 1, cb), jnp.float32),
        grid_spec=pltpu.PrefetchScalarGridSpec(
            num_scalar_prefetch=0,
            grid=(num_cb, num_hw),
            in_specs=[
                # per-class-block, per-hw-tile slab of the (N, C, HW) input
                pl.BlockSpec((N, cb, hw), lambda ci, hi: (0, ci, hi)),
                # target: index independent of ci -> re-fetched only per class block
                pl.BlockSpec((N, hw), lambda ci, hi: (0, hi)),
            ],
            out_specs=pl.BlockSpec((1, 1, cb), lambda ci, hi: (ci, 0, 0)),
            scratch_shapes=[
                pltpu.VMEM((N, cb), jnp.float32),        # intersection accumulator
                pltpu.VMEM((N, cb), jnp.float32),        # input-sum accumulator
                pltpu.VMEM((N, cb), jnp.float32),        # target-sum accumulator
            ],
        ),
        compiler_params=pltpu.CompilerParams(
            dimension_semantics=("parallel", "arbitrary"),
        ),
    )(inp_r, tgt_r)

    dice_per_class = out.reshape(-1)[:C]                 # dice for classes 0..C-1
    cls_dice = dice_per_class[1:]                        # skip class 0 (as in PyTorch)
    if weight is not None:
        cls_dice = cls_dice * jnp.asarray(weight, dtype=cls_dice.dtype)[1:C]
    return jnp.sum(cls_dice) / (C - 1)


def _reference(inp, tgt, weight=None):
    # pure-JAX reference mirroring the PyTorch module
    N, C, H, W = inp.shape
    onehot = jax.nn.one_hot(tgt, C, axis=1, dtype=jnp.float32)    # (N, C, H, W)
    smooth = 1e-12
    total = 0.0
    for i in range(1, C):
        x = inp[:, i].reshape(N, -1).astype(jnp.float32)
        t = onehot[:, i].reshape(N, -1)
        inter = jnp.sum(x * t, axis=1)
        per_n = 2.0 * (inter + smooth) / (jnp.sum(x, axis=1) + jnp.sum(t, axis=1) + smooth)
        d = 1.0 - jnp.sum(per_n) / N
        if weight is not None:
            d = d * weight[i]
        total = total + d
    return total / (C - 1)


if __name__ == "__main__":
    key = jax.random.PRNGKey(0)
    k1, k2 = jax.random.split(key)

    N, C, H, W = 2, 4, 16, 16
    # per-class probabilities (softmax over channels), like a segmentation net output
    logits = jax.random.normal(k1, (N, C, H, W), dtype=jnp.float32)
    x = jax.nn.softmax(logits, axis=1)
    # integer class labels
    target = jax.random.randint(k2, (N, H, W), 0, C, dtype=jnp.int32)

    loss = multiclass_dice_loss(x, target)
    loss = jax.block_until_ready(loss)

    ref = jax.block_until_ready(_reference(x, target))
    assert jnp.allclose(loss, ref, rtol=1e-5, atol=1e-6), (loss, ref)

    print("KERNEL_OK")
</pallas_src>

<mosaic_0001>
module attributes {stable_mosaic.version = 11 : i64} {
  func.func @_mcdice_kernel(%arg0: i32, %arg1: i32, %arg2: memref<2x4x256xf32, #tpu.memory_space<vmem>>, %arg3: memref<2x256xi8, #tpu.memory_space<vmem>>, %arg4: memref<1x1x4xf32, #tpu.memory_space<vmem>>, %arg5: memref<2x4xf32, #tpu.memory_space<vmem>>, %arg6: memref<2x4xf32, #tpu.memory_space<vmem>>, %arg7: memref<2x4xf32, #tpu.memory_space<vmem>>) attributes {dimension_semantics = [#tpu.dimension_semantics<parallel>, #tpu.dimension_semantics<arbitrary>], iteration_bounds = array<i64: 1, 1>, scalar_prefetch = 0 : i64, scratch_operands = 3 : i64, tpu.core_type = #tpu.core_type<tc>, window_params = [{transform_indices = @transform_0, window_bounds = array<i64: 2, 4, 256>}, {transform_indices = @transform_1, window_bounds = array<i64: 2, 256>}, {transform_indices = @transform_2, window_bounds = array<i64: 1, 1, 4>}]} {
    %c0_i32 = arith.constant 0 : i32
    %0 = arith.cmpi eq, %arg1, %c0_i32 : i32
    %1 = arith.extui %0 : i1 to i32
    %c0_i32_0 = arith.constant 0 : i32
    %2 = arith.cmpi ne, %1, %c0_i32_0 : i32
    scf.if %2 {
      %cst_21 = arith.constant 0.000000e+00 : f32
      %32 = vector.broadcast %cst_21 : f32 to vector<2x4xf32>
      %c0_22 = arith.constant 0 : index
      %c0_23 = arith.constant 0 : index
      %33 = vector.load %arg5[%c0_22, %c0_23] : memref<2x4xf32, #tpu.memory_space<vmem>>, vector<2x4xf32>
      tpu.vector_store %arg5[%c0_22, %c0_23], %32 {strides = array<i32>} : memref<2x4xf32, #tpu.memory_space<vmem>>, vector<2x4xf32>,
      %cst_24 = arith.constant 0.000000e+00 : f32
      %34 = vector.broadcast %cst_24 : f32 to vector<2x4xf32>
      %c0_25 = arith.constant 0 : index
      %c0_26 = arith.constant 0 : index
      %35 = vector.load %arg6[%c0_25, %c0_26] : memref<2x4xf32, #tpu.memory_space<vmem>>, vector<2x4xf32>
      tpu.vector_store %arg6[%c0_25, %c0_26], %34 {strides = array<i32>} : memref<2x4xf32, #tpu.memory_space<vmem>>, vector<2x4xf32>,
      %cst_27 = arith.constant 0.000000e+00 : f32
      %36 = vector.broadcast %cst_27 : f32 to vector<2x4xf32>
      %c0_28 = arith.constant 0 : index
      %c0_29 = arith.constant 0 : index
      %37 = vector.load %arg7[%c0_28, %c0_29] : memref<2x4xf32, #tpu.memory_space<vmem>>, vector<2x4xf32>
      tpu.vector_store %arg7[%c0_28, %c0_29], %36 {strides = array<i32>} : memref<2x4xf32, #tpu.memory_space<vmem>>, vector<2x4xf32>,
    } else {
    }
    %c0 = arith.constant 0 : index
    %c0_1 = arith.constant 0 : index
    %c0_2 = arith.constant 0 : index
    %3 = vector.load %arg2[%c0, %c0_1, %c0_2] : memref<2x4x256xf32, #tpu.memory_space<vmem>>, vector<2x4x256xf32>
    %c0_3 = arith.constant 0 : index
    %c0_4 = arith.constant 0 : index
    %4 = vector.load %arg3[%c0_3, %c0_4] : memref<2x256xi8, #tpu.memory_space<vmem>>, vector<2x256xi8>
    %5 = arith.extsi %4 : vector<2x256xi8> to vector<2x256xi32>
    %c4_i32 = arith.constant 4 : i32
    %6 = arith.muli %arg0, %c4_i32 : i32
    %7 = tpu.iota {dimensions = array<i32: 1>} : vector<1x4x1xi32>
    %8 = vector.broadcast %6 : i32 to vector<1x4x1xi32>
    %9 = arith.addi %8, %7 : vector<1x4x1xi32>
    %10 = vector.shape_cast %5 : vector<2x256xi32> to vector<2x1x256xi32>
    %11 = vector.broadcast %10 : vector<2x1x256xi32> to vector<2x4x256xi32>
    %12 = vector.broadcast %9 : vector<1x4x1xi32> to vector<2x4x256xi32>
    %13 = arith.cmpi eq, %11, %12 : vector<2x4x256xi32>
    %14 = arith.extui %13 : vector<2x4x256xi1> to vector<2x4x256xi32>
    %15 = arith.sitofp %14 : vector<2x4x256xi32> to vector<2x4x256xf32>
    %c0_5 = arith.constant 0 : index
    %c0_6 = arith.constant 0 : index
    %16 = vector.load %arg5[%c0_5, %c0_6] : memref<2x4xf32, #tpu.memory_space<vmem>>, vector<2x4xf32>
    %17 = arith.mulf %3, %15 : vector<2x4x256xf32>
    %cst = arith.constant dense<0.000000e+00> : vector<2x4xf32>
    %18 = vector.multi_reduction <add>, %17, %cst [2] : vector<2x4x256xf32> to vector<2x4xf32>
    %19 = arith.addf %16, %18 : vector<2x4xf32>
    %c0_7 = arith.constant 0 : index
    %c0_8 = arith.constant 0 : index
    %20 = vector.load %arg5[%c0_7, %c0_8] : memref<2x4xf32, #tpu.memory_space<vmem>>, vector<2x4xf32>
    tpu.vector_store %arg5[%c0_7, %c0_8], %19 {strides = array<i32>} : memref<2x4xf32, #tpu.memory_space<vmem>>, vector<2x4xf32>,
    %c0_9 = arith.constant 0 : index
    %c0_10 = arith.constant 0 : index
    %21 = vector.load %arg6[%c0_9, %c0_10] : memref<2x4xf32, #tpu.memory_space<vmem>>, vector<2x4xf32>
    %cst_11 = arith.constant dense<0.000000e+00> : vector<2x4xf32>
    %22 = vector.multi_reduction <add>, %3, %cst_11 [2] : vector<2x4x256xf32> to vector<2x4xf32>
    %23 = arith.addf %21, %22 : vector<2x4xf32>
    %c0_12 = arith.constant 0 : index
    %c0_13 = arith.constant 0 : index
    %24 = vector.load %arg6[%c0_12, %c0_13] : memref<2x4xf32, #tpu.memory_space<vmem>>, vector<2x4xf32>
    tpu.vector_store %arg6[%c0_12, %c0_13], %23 {strides = array<i32>} : memref<2x4xf32, #tpu.memory_space<vmem>>, vector<2x4xf32>,
    %c0_14 = arith.constant 0 : index
    %c0_15 = arith.constant 0 : index
    %25 = vector.load %arg7[%c0_14, %c0_15] : memref<2x4xf32, #tpu.memory_space<vmem>>, vector<2x4xf32>
    %cst_16 = arith.constant dense<0.000000e+00> : vector<2x4xf32>
    %26 = vector.multi_reduction <add>, %15, %cst_16 [2] : vector<2x4x256xf32> to vector<2x4xf32>
    %27 = arith.addf %25, %26 : vector<2x4xf32>
    %c0_17 = arith.constant 0 : index
    %c0_18 = arith.constant 0 : index
    %28 = vector.load %arg7[%c0_17, %c0_18] : memref<2x4xf32, #tpu.memory_space<vmem>>, vector<2x4xf32>
    tpu.vector_store %arg7[%c0_17, %c0_18], %27 {strides = array<i32>} : memref<2x4xf32, #tpu.memory_space<vmem>>, vector<2x4xf32>,
    %c0_i32_19 = arith.constant 0 : i32
    %29 = arith.cmpi eq, %arg1, %c0_i32_19 : i32
    %30 = arith.extui %29 : i1 to i32
    %c0_i32_20 = arith.constant 0 : i32
    %31 = arith.cmpi ne, %30, %c0_i32_20 : i32
    scf.if %31 {
      %c0_21 = arith.constant 0 : index
      %c0_22 = arith.constant 0 : index
      %32 = vector.load %arg5[%c0_21, %c0_22] : memref<2x4xf32, #tpu.memory_space<vmem>>, vector<2x4xf32>
      %cst_23 = arith.constant 9.99999996E-13 : f32
      %33 = vector.broadcast %cst_23 : f32 to vector<2x4xf32>
      %34 = arith.addf %32, %33 : vector<2x4xf32>
      %cst_24 = arith.constant 2.000000e+00 : f32
      %35 = vector.broadcast %cst_24 : f32 to vector<2x4xf32>
      %36 = arith.mulf %35, %34 : vector<2x4xf32>
      %c0_25 = arith.constant 0 : index
      %c0_26 = arith.constant 0 : index
      %37 = vector.load %arg6[%c0_25, %c0_26] : memref<2x4xf32, #tpu.memory_space<vmem>>, vector<2x4xf32>
      %c0_27 = arith.constant 0 : index
      %c0_28 = arith.constant 0 : index
      %38 = vector.load %arg7[%c0_27, %c0_28] : memref<2x4xf32, #tpu.memory_space<vmem>>, vector<2x4xf32>
      %39 = arith.addf %37, %38 : vector<2x4xf32>
      %cst_29 = arith.constant 9.99999996E-13 : f32
      %40 = vector.broadcast %cst_29 : f32 to vector<2x4xf32>
      %41 = arith.addf %39, %40 : vector<2x4xf32>
      %42 = arith.divf %36, %41 : vector<2x4xf32>
      %cst_30 = arith.constant dense<0.000000e+00> : vector<4xf32>
      %43 = vector.multi_reduction <add>, %42, %cst_30 [0] : vector<2x4xf32> to vector<4xf32>
      %44 = vector.shape_cast %43 : vector<4xf32> to vector<1x4xf32>
      %cst_31 = arith.constant 2.000000e+00 : f32
      %45 = vector.broadcast %cst_31 : f32 to vector<1x4xf32>
      %46 = arith.divf %44, %45 : vector<1x4xf32>
      %cst_32 = arith.constant 1.000000e+00 : f32
      %47 = vector.broadcast %cst_32 : f32 to vector<1x4xf32>
      %48 = arith.subf %47, %46 : vector<1x4xf32>
      %49 = vector.shape_cast %48 : vector<1x4xf32> to vector<1x1x4xf32>
      %c0_33 = arith.constant 0 : index
      %c0_34 = arith.constant 0 : index
      %c0_35 = arith.constant 0 : index
      %50 = vector.load %arg4[%c0_33, %c0_34, %c0_35] : memref<1x1x4xf32, #tpu.memory_space<vmem>>, vector<1x1x4xf32>
      tpu.vector_store %arg4[%c0_33, %c0_34, %c0_35], %49 {strides = array<i32>} : memref<1x1x4xf32, #tpu.memory_space<vmem>>, vector<1x1x4xf32>,
    } else {
    }
    return
  }
  func.func @transform_0(%arg0: i32, %arg1: i32) -> (i32, i32, i32) {
    %c0_i32 = arith.constant 0 : i32
    %c0_i32_0 = arith.constant 0 : i32
    return %c0_i32, %arg0, %arg1 : i32, i32, i32
  }
  func.func @transform_1(%arg0: i32, %arg1: i32) -> (i32, i32) {
    %c0_i32 = arith.constant 0 : i32
    %c0_i32_0 = arith.constant 0 : i32
    return %c0_i32, %arg1 : i32, i32
  }
  func.func @transform_2(%arg0: i32, %arg1: i32) -> (i32, i32, i32) {
    %c0_i32 = arith.constant 0 : i32
    %c0_i32_0 = arith.constant 0 : i32
    %c0_i32_1 = arith.constant 0 : i32
    return %arg0, %c0_i32, %c0_i32_0 : i32, i32, i32
  }
}

</mosaic_0001>

<llo_original>
// kernel: multiclass_dice_loss.1
$region0: #{multiclass_dice_loss.1}
  #allocation0 [shape = 'u32[]', space=smem, size = 0x4, offset = 0x4, fixed_abs, tag = 'smem constant byte address 0x4 - core index']
  #allocation1 [shape = 'u32[144,128]{1,0:T(1,128)}', space=vmem, size = 0x12000, scoped, tag = 'internal scratch']
  #allocation2 [shape = 'f32[2,4]{1,0:T(2,128)}', space=vmem, size = 0x400, scoped, tag = 'scratch operand']
  #allocation3 [shape = 'f32[2,4]{1,0:T(2,128)}', space=vmem, size = 0x400, scoped, tag = 'scratch operand']
  #allocation4 [shape = 'f32[2,4]{1,0:T(2,128)}', space=vmem, size = 0x400, scoped, tag = 'scratch operand']
  %s0 = inlined_call_operand.vmem [shape: f32[2,4,256], index: 0, kind: input, shape index: {}]
  %s1 = inlined_call_operand.vmem [shape: s8[2,256], index: 1, kind: input, shape index: {}]
  %s2 = inlined_call_operand.vmem [shape: f32[1,1,4], index: 2, kind: output, shape index: {}]
  %s3 = sld [smem:[#allocation0]]
  $region26: #{multiclass_dice_loss.1} parent=0
    _
  %s5 = ssub.s32 1, %s3
  %s6 = scalar_select 0, %s5, %s3
  // Predicated region
  $region2: #{multiclass_dice_loss.1} parent=0 // pred_check
    _
  $region3: #{multiclass_dice_loss.1} parent=0 // pred_check_branch
    %8 = sbr.rel (0) target = $region5
  $region4: #{multiclass_dice_loss.1} parent=0 // pred_region
    _
  $region5: #{multiclass_dice_loss.1} parent=0 // pred_fallthru
    _
  // Predicated region
  $region6: #{multiclass_dice_loss.1} parent=0 // pred_check
    _
  $region7: #{multiclass_dice_loss.1} parent=0 // pred_check_branch
    %10 = sbr.rel (0) target = $region9
  $region8: #{multiclass_dice_loss.1} parent=0 // pred_region
    _
  $region9: #{multiclass_dice_loss.1} parent=0 // pred_fallthru
    _
  %p11 = scmp.eq.s32.totalorder 0, 0
  // Predicated region
  $region10: #{multiclass_dice_loss.1} parent=0 // pred_check
    %p12 = pneg %p11
  $region11: #{multiclass_dice_loss.1} parent=0 // pred_check_branch
    %14 = sbr.rel (%p12) target = $region13
  $region12: #{multiclass_dice_loss.1} parent=0 // pred_region
    %vm15 = vcmask 25600
    %16 = vst.msk [vmem:[#allocation2] sm:$0x3] %vm15, 0.0
    %17 = vst.msk [vmem:[#allocation3] sm:$0x3] %vm15, 0.0
    %18 = vst.msk [vmem:[#allocation4] sm:$0x3] %vm15, 0.0
  $region13: #{multiclass_dice_loss.1} parent=0 // pred_fallthru
    _
  %v19 = vld [vmem:[%s0] sm:$0xff]
  %v20 = vld [vmem:[%s0 + $0x8] sm:$0xff]
  %v21 = vld [vmem:[%s1] sm:$0x3]
  %v22 = vunpack.c.0.s8 %v21
  %s23 = smul.u32 0, 4
  %v24 = vlaneseq
  %v25 = vshrl.u32 %v24, 7
  %v26 = vstv %s23
  %v27 = vadd.s32 %v26, %v25
  %v29 = vunpack.c.l.s4 1966171168
  %v30 = vunpack.c.0.s8 %v29
  %v31 = vlaneseq
  %v32 = vshrl.u32 %v31, 7
  %v33 = vsub.s32 %v30, %v32
  %v34 = vrot.slane %v22, %v33
  %v35 = vcombine.high %v34, %v34
  %v37 = vunpack.c.l.s4 1966171168
  %v38 = vunpack.c.0.s8 %v37
  %v39 = vlaneseq
  %v40 = vshrl.u32 %v39, 7
  %v41 = vsub.s32 %v38, %v40
  %v42 = vrot.slane %v34, %v41
  %v44 = vunpack.c.l.s4 1966171168
  %v45 = vunpack.c.0.s8 %v44
  %v46 = vlaneseq
  %v47 = vshrl.u32 %v46, 7
  %v48 = vsub.s32 %v45, %v47
  %v49 = vrot.slane %v35, %v48
  %v50 = vlaneseq
  %v51 = vshrl.u32 %v50, 7
  %v52 = vsub.s32 0, %v51
  %v53 = vrot.slane %v42, %v52
  %v54 = vlaneseq
  %v55 = vshrl.u32 %v54, 7
  %v56 = vsub.s32 1, %v55
  %v57 = vrot.slane %v42, %v56
  %v58 = vlaneseq
  %v59 = vshrl.u32 %v58, 7
  %v60 = vsub.s32 0, %v59
  %v61 = vrot.slane %v49, %v60
  %v62 = vlaneseq
  %v63 = vshrl.u32 %v62, 7
  %v64 = vsub.s32 1, %v63
  %v65 = vrot.slane %v49, %v64
  %vm66 = vcmp.eq.s32.totalorder %v53, %v27
  %vm67 = vcmp.eq.s32.totalorder %v57, %v27
  %vm68 = vcmp.eq.s32.totalorder %v61, %v27
  %vm69 = vcmp.eq.s32.totalorder %v65, %v27
  %v70 = vsel %vm66, 1, 0
  %v71 = vsel %vm67, 1, 0
  %v72 = vsel %vm68, 1, 0
  %v73 = vsel %vm69, 1, 0
  %v74 = vcvt.s32.f32 %v70
  %v75 = vcvt.s32.f32 %v71
  %v76 = vcvt.s32.f32 %v72
  %v77 = vcvt.s32.f32 %v73
  %v78 = vld [vmem:[#allocation2] sm:$0x3]
  %v83 = vcombine.low %v74, %v75
  %v84 = vcombine.low %v76, %v77
  %v87 = vmul.f32 %v19, %v83
  %v88 = vmul.f32 %v20, %v84
  %v91 = vcombine.high %v87, %v87
  %v92 = vcombine.high %v88, %v88
  %vm95 = vcmask 1043456
  %v96 = vsel %vm95, %v87, 0.0
  %v97 = vsel %vm95, %v91, 0.0
  %v98 = vadd.f32 %v96, %v97
  %99 = vadd.xlane.f32.xlu0 %v98
  %v100 = vpop.xlane.xlu0 %99
  %v101 = vsel %vm95, %v88, 0.0
  %v102 = vsel %vm95, %v92, 0.0
  %v103 = vadd.f32 %v101, %v102
  %104 = vadd.xlane.f32.xlu0 %v103
  %v105 = vpop.xlane.xlu0 %104
  %v108 = vlaneseq
  %v109 = vand.u32 %v108, 127
  %v110 = vlaneseq
  %v111 = vshrl.u32 %v110, 7
  %v112 = vsub.s32 %v109, %v111
  %v113 = vrot.slane %v100, %v112
  %v114 = vlaneseq
  %v115 = vshrl.u32 %v114, 7
  %v116 = vsub.s32 %v109, %v115
  %v117 = vrot.slane %v105, %v116
  %vm118 = vcmask 1041409
  %v119 = vsel %vm118, %v117, %v113
  %v121 = vadd.f32 %v78, %v119
  %vm122 = vcmask 25600
  %123 = vst.msk [vmem:[#allocation2] sm:$0x3] %vm122, %v121
  %v124 = vld [vmem:[#allocation3] sm:$0x3]
  %v127 = vcombine.high %v19, %v19
  %v128 = vcombine.high %v20, %v20
  %v131 = vsel %vm95, %v19, 0.0
  %v132 = vsel %vm95, %v127, 0.0
  %v133 = vadd.f32 %v131, %v132
  %134 = vadd.xlane.f32.xlu0 %v133
  %v135 = vpop.xlane.xlu0 %134
  %v136 = vsel %vm95, %v20, 0.0
  %v137 = vsel %vm95, %v128, 0.0
  %v138 = vadd.f32 %v136, %v137
  %139 = vadd.xlane.f32.xlu0 %v138
  %v140 = vpop.xlane.xlu0 %139
  %v143 = vlaneseq
  %v144 = vshrl.u32 %v143, 7
  %v145 = vsub.s32 %v109, %v144
  %v146 = vrot.slane %v135, %v145
  %v147 = vlaneseq
  %v148 = vshrl.u32 %v147, 7
  %v149 = vsub.s32 %v109, %v148
  %v150 = vrot.slane %v140, %v149
  %v151 = vsel %vm118, %v150, %v146
  %v153 = vadd.f32 %v124, %v151
  %154 = vst.msk [vmem:[#allocation3] sm:$0x3] %vm122, %v153
  %v155 = vld [vmem:[#allocation4] sm:$0x3]
  %v156 = vsel %vm95, %v74, 0.0
  %v157 = vsel %vm95, %v75, 0.0
  %v158 = vadd.f32 %v156, %v157
  %159 = vadd.xlane.f32.xlu0 %v158
  %v160 = vpop.xlane.xlu0 %159
  %v161 = vsel %vm95, %v76, 0.0
  %v162 = vsel %vm95, %v77, 0.0
  %v163 = vadd.f32 %v161, %v162
  %164 = vadd.xlane.f32.xlu0 %v163
  %v165 = vpop.xlane.xlu0 %164
  %v168 = vlaneseq
  %v169 = vshrl.u32 %v168, 7
  %v170 = vsub.s32 %v109, %v169
  %v171 = vrot.slane %v160, %v170
  %v172 = vlaneseq
  %v173 = vshrl.u32 %v172, 7
  %v174 = vsub.s32 %v109, %v173
  %v175 = vrot.slane %v165, %v174
  %v176 = vsel %vm118, %v175, %v171
  %v178 = vadd.f32 %v155, %v176
  %179 = vst.msk [vmem:[#allocation4] sm:$0x3] %vm122, %v178
  // Predicated region
  $region14: #{multiclass_dice_loss.1} parent=0 // pred_check
    %p180 = pneg %p11
  $region15: #{multiclass_dice_loss.1} parent=0 // pred_check_branch
    %182 = sbr.rel (%p180) target = $region17
  $region16: #{multiclass_dice_loss.1} parent=0 // pred_region
    %v183 = vld [vmem:[#allocation2] sm:$0x3]
    %v184 = vadd.f32 %v183, 1e-12
    %v185 = vmul.f32 %v184, 2.0
    %v186 = vld [vmem:[#allocation3] sm:$0x3]
    %v187 = vld [vmem:[#allocation4] sm:$0x3]
    %v188 = vadd.f32 %v186, %v187
    %v189 = vadd.f32 %v188, 1e-12
    %v190 = vrcp.pop %v189
    %v191 = vmul.f32 %v185, %v190
    %v192 = vsel %vm122, %v191, 0.0
    %v193 = vrot.slane %v192, 4
    %v194 = vadd.f32 %v192, %v193
    %v195 = vrot.slane %v194, 2
    %v196 = vadd.f32 %v194, %v195
    %v197 = vrot.slane %v196, 1
    %v198 = vadd.f32 %v196, %v197
    %v199 = vrcp.pop 2.0
    %v200 = vmul.f32 %v198, %v199
    %v201 = vsub.f32 1.0, %v200
    %vm202 = vcmask 24576
    %203 = vst.msk [vmem:[%s2] sm:$0x1] %vm202, %v201
  $region17: #{multiclass_dice_loss.1} parent=0 // pred_fallthru
    _
  // Predicated region
  $region18: #{multiclass_dice_loss.1} parent=0 // pred_check
    _
  $region19: #{multiclass_dice_loss.1} parent=0 // pred_check_branch
    %205 = sbr.rel (0) target = $region21
  $region20: #{multiclass_dice_loss.1} parent=0 // pred_region
    _
  $region21: #{multiclass_dice_loss.1} parent=0 // pred_fallthru
    _
  // Predicated region
  $region22: #{multiclass_dice_loss.1} parent=0 // pred_check
    _
  $region23: #{multiclass_dice_loss.1} parent=0 // pred_check_branch
    %207 = sbr.rel (0) target = $region25
  $region24: #{multiclass_dice_loss.1} parent=0 // pred_region
    _
  $region25: #{multiclass_dice_loss.1} parent=0 // pred_fallthru
    _

</llo_original>
